<compile_context>
chip_gen: v6e
topology: v6e:2x2x1
jax: 0.10.0
libtpu: 0.0.40
codegen_flags: <defaults>
</compile_context>

<pallas_src>
import functools

import jax
import jax.numpy as jnp
from jax.experimental import pallas as pl
from jax.experimental.pallas import tpu as pltpu


def _round_up(x, m):
    return (x + m - 1) // m * m


def _cdiv(a, b):
    return -(-a // b)


def _vmem_budget_bytes():
    """Generation-aware VMEM budget (v5e/v6e: 128 MiB parts, v7x: 64 MiB)."""
    cap = 64 << 20
    try:
        info = pltpu.get_tpu_info()
        cap = int(getattr(info, "vmem_capacity_bytes", cap))
    except Exception:
        pass
    return max(cap - (16 << 20), 32 << 20)   # leave headroom for compiler scratch


def _single_buffered_spec(block_shape, index_map):
    """BlockSpec for a grid-invariant block: single buffer if supported."""
    if hasattr(pl, "Buffered"):
        try:
            return pl.BlockSpec(block_shape, index_map, pipeline_mode=pl.Buffered(1))
        except TypeError:
            pass
    return pl.BlockSpec(block_shape, index_map)


def _estimate_vmem(tm, tn, dp, ncol, x_isz, w_isz):
    """VMEM estimate including the compiler-managed f32 intermediates."""
    est = 2 * tm * dp * x_isz                 # x row tile (double buffered)
    est += 2 * tm * tn * x_isz                # output tile (double buffered)
    if ncol > 1:
        est += 2 * tm * tn * x_isz            # residual column slice of x
        est += 2 * dp * (2 * tn) * w_isz      # streamed fused-weight tile
        est += 2 * (2 * tn) * 4               # streamed fused bias
    else:
        est += dp * (2 * dp) * w_isz          # resident fused weight (single buffer)
        est += (2 * dp) * 4                   # resident fused bias (single buffer)
    # f32 intermediates: xw (tm, 2*tn) + residual/gate/combine temps (tm, tn)
    est += 4 * tm * (2 * tn) + 3 * 4 * tm * tn
    return est


# --------------------------------------------------------------------------
# Kernels
# --------------------------------------------------------------------------
def _highway_kernel_resident(x_ref, w_ref, b_ref, o_ref, *, dp):
    """Single column tile (weight fully VMEM-resident).

    x_ref : [tm, dp]     activations
    w_ref : [dp, 2*dp]   fused [W1 | W2], (in, out) layout
    b_ref : [1, 2*dp]    fused [b1 | b2], f32
    o_ref : [tm, dp]
    """
    xf = x_ref[...]
    x = xf if xf.dtype == w_ref.dtype else xf.astype(w_ref.dtype)
    xw = jnp.dot(x, w_ref[...], preferred_element_type=jnp.float32) + b_ref[...]
    x1 = xw[:, :dp]                                 # W1 x + b1   (128-lane aligned)
    x2 = xw[:, dp:]                                 # W2 x + b2
    xr = xf.astype(jnp.float32)
    g = jax.nn.sigmoid(x2)
    y = xr + g * (jnp.maximum(x1, 0.0) - xr)        # == g*relu(x1) + (1-g)*x
    o_ref[...] = y.astype(o_ref.dtype)


def _highway_kernel_tiled(xr_ref, x_ref, w_ref, b_ref, o_ref, *, tn):
    """Column-tiled path (weight streamed per output-column tile).

    xr_ref : [tm, tn]     residual slice of x for this column tile
    x_ref  : [tm, dp]     full rows of x (for the matmul)
    w_ref  : [dp, 2*tn]   streamed fused tile [W1_j | W2_j]
    b_ref  : [1, 2*tn]    fused bias tile [b1_j | b2_j], f32
    o_ref  : [tm, tn]
    """
    xf = x_ref[...]
    x = xf if xf.dtype == w_ref.dtype else xf.astype(w_ref.dtype)
    xw = jnp.dot(x, w_ref[...], preferred_element_type=jnp.float32) + b_ref[...]
    x1 = xw[:, :tn]                                 # 128-lane aligned slices
    x2 = xw[:, tn:]
    xr = xr_ref[...].astype(jnp.float32)
    g = jax.nn.sigmoid(x2)
    y = xr + g * (jnp.maximum(x1, 0.0) - xr)
    o_ref[...] = y.astype(o_ref.dtype)


# --------------------------------------------------------------------------
# Parameter preparation (done ONCE at model init — hoisted out of the call path)
# --------------------------------------------------------------------------
def prepare_highway_params(w1, b1, w2, b2, *, mxu_dtype=None, max_tn=512):
    """Pad to 128 lanes, fuse W1/W2 per column tile, and cast once.

    w1, w2 : [D, D] weights in (in, out) layout (i.e. torch weight transposed)
    b1, b2 : [D] biases
    mxu_dtype : optional dtype for the MXU (e.g. jnp.bfloat16 for f32 inputs)
    Returns (w_fused [Dp, 2*Dp], b_fused [1, 2*Dp] f32, tn) where tn is the
    column-tile width (a 128-multiple divisor of Dp; == Dp means fully resident).
    """
    d = w1.shape[0]
    dp = _round_up(d, 128)
    pad = dp - d
    w1 = jnp.pad(w1, ((0, pad), (0, pad)))
    w2 = jnp.pad(w2, ((0, pad), (0, pad)))
    b1 = jnp.pad(b1, (0, pad))
    b2 = jnp.pad(b2, (0, pad))

    # Largest 128-multiple divisor of dp that is <= max_tn.
    tn = 128
    for cand in range(min(dp, _round_up(max(max_tn, 128), 128)), 0, -128):
        if dp % cand == 0:
            tn = cand
            break
    ncol = dp // tn

    wdt = mxu_dtype if mxu_dtype is not None else w1.dtype
    # Interleave per column tile: fused cols [2j*tn,(2j+1)*tn) = W1 tile j,
    # [(2j+1)*tn,(2j+2)*tn) = W2 tile j  -> one MXU matmul per grid step.
    w1r = w1.reshape(dp, ncol, 1, tn)
    w2r = w2.reshape(dp, ncol, 1, tn)
    w_fused = jnp.concatenate([w1r, w2r], axis=2).reshape(dp, 2 * dp).astype(wdt)
    b1r = b1.reshape(ncol, 1, tn).astype(jnp.float32)
    b2r = b2.reshape(ncol, 1, tn).astype(jnp.float32)
    b_fused = jnp.concatenate([b1r, b2r], axis=1).reshape(1, 2 * dp)
    return w_fused, b_fused, tn


# --------------------------------------------------------------------------
# Fused highway layer
# --------------------------------------------------------------------------
@functools.partial(jax.jit, static_argnames=("tn", "tm"))
def highway_network(x, w_fused, b_fused, *, tn, tm=1024):
    """x: [..., D];  (w_fused, b_fused, tn) from prepare_highway_params."""
    orig_shape = x.shape
    d = orig_shape[-1]
    dp = w_fused.shape[0]
    ncol = dp // tn

    x2d = x.reshape(-1, d)
    n = x2d.shape[0]

    x_isz = jnp.dtype(x.dtype).itemsize
    w_isz = jnp.dtype(w_fused.dtype).itemsize
    budget = _vmem_budget_bytes()

    # Row tile: big (hides streamed-weight DMA under the MXU), multiple of 8,
    # at least 2 grid steps when possible (v7x: feed both TensorCores),
    # shrunk until the VMEM estimate fits the generation budget.
    tm_eff = min(_round_up(tm, 8), _round_up(n, 8))
    if ncol == 1 and n > 8:
        tm_eff = min(tm_eff, _round_up(_cdiv(n, 2), 8))
    while _estimate_vmem(tm_eff, tn, dp, ncol, x_isz, w_isz) > budget and tm_eff > 64:
        tm_eff = max(64, _round_up(tm_eff // 2, 8))
    # Balance row tiles to minimise padding waste.
    ni = _cdiv(n, tm_eff)
    tm_eff = _round_up(_cdiv(n, ni), 8)
    n_pad = ni * tm_eff

    est = _estimate_vmem(tm_eff, tn, dp, ncol, x_isz, w_isz)
    vmem_limit = int(min(budget, max(est + est // 4 + (2 << 20), 32 << 20)))

    if dp != d:
        x2d = jnp.pad(x2d, ((0, 0), (0, dp - d)))
    if n_pad != n:
        x2d = jnp.pad(x2d, ((0, n_pad - n), (0, 0)))

    if ncol == 1:
        # Fused weight fully VMEM-resident (single-buffered: grid-invariant).
        grid = (ni,)
        kernel = functools.partial(_highway_kernel_resident, dp=dp)
        in_specs = [
            pl.BlockSpec((tm_eff, dp), lambda i: (i, 0)),
            _single_buffered_spec((dp, 2 * dp), lambda i: (0, 0)),
            _single_buffered_spec((1, 2 * dp), lambda i: (0, 0)),
        ]
        out_specs = pl.BlockSpec((tm_eff, dp), lambda i: (i, 0))
        args = (x2d, w_fused, b_fused)
        dims = ("parallel",)
    else:
        # Column-tiled: stream (dp, 2*tn) fused-weight tiles; residual comes in
        # as its own lane-aligned (tm, tn) slice of x (no dynamic lane slicing).
        grid = (ni, ncol)
        kernel = functools.partial(_highway_kernel_tiled, tn=tn)
        in_specs = [
            pl.BlockSpec((tm_eff, tn), lambda i, j: (i, j)),   # residual slice
            pl.BlockSpec((tm_eff, dp), lambda i, j: (i, 0)),   # full rows for matmul
            pl.BlockSpec((dp, 2 * tn), lambda i, j: (0, j)),   # streamed [W1_j | W2_j]
            pl.BlockSpec((1, 2 * tn), lambda i, j: (0, j)),    # fused bias tile
        ]
        out_specs = pl.BlockSpec((tm_eff, tn), lambda i, j: (i, j))
        args = (x2d, x2d, w_fused, b_fused)
        dims = ("parallel", "parallel")

    y = pl.pallas_call(
        kernel,
        out_shape=jax.ShapeDtypeStruct((n_pad, dp), x.dtype),
        grid_spec=pltpu.PrefetchScalarGridSpec(
            num_scalar_prefetch=0,
            grid=grid,
            in_specs=in_specs,
            out_specs=out_specs,
        ),
        compiler_params=pltpu.CompilerParams(
            dimension_semantics=dims,
            vmem_limit_bytes=vmem_limit,
        ),
    )(*args)

    return y[:n, :d].reshape(orig_shape)


# --------------------------------------------------------------------------
# Reference + self-test
# --------------------------------------------------------------------------
def highway_reference(x, w1, b1, w2, b2):
    hp = jax.lax.Precision.HIGHEST
    x1 = jnp.dot(x, w1, precision=hp) + b1
    x2 = jnp.dot(x, w2, precision=hp) + b2
    g = jax.nn.sigmoid(x2)
    return g * jnp.maximum(x1, 0.0) + (1.0 - g) * x


if __name__ == "__main__":
    key = jax.random.PRNGKey(0)

    def torch_like_params(k, size):
        # PyTorch nn.Linear stores weight as [out, in]; W1.bias is zeroed.
        kw1, kw2, kb2 = jax.random.split(k, 3)
        w1 = jax.random.normal(kw1, (size, size), jnp.float32) * 0.1
        w2 = jax.random.normal(kw2, (size, size), jnp.float32) * 0.1
        b1 = jnp.zeros((size,), jnp.float32)
        b2 = jax.random.normal(kb2, (size,), jnp.float32) * 0.1
        return w1.T, b1, w2.T, b2          # (in, out) layout for x @ W

    def check(size, batch, seq, k, *, max_tn=512, mxu_dtype=None, atol=1e-4, rtol=1e-4):
        kp, kx = jax.random.split(k)
        w1t, b1, w2t, b2 = torch_like_params(kp, size)
        x = jax.random.normal(kx, (batch, seq, size), jnp.float32)
        w_fused, b_fused, tn = prepare_highway_params(
            w1t, b1, w2t, b2, mxu_dtype=mxu_dtype, max_tn=max_tn)
        y = highway_network(x, w_fused, b_fused, tn=tn)
        jax.block_until_ready(y)
        y_ref = highway_reference(x, w1t, b1, w2t, b2)
        assert y.shape == x.shape
        assert jnp.allclose(y, y_ref, atol=atol, rtol=rtol), (
            f"mismatch: size={size} max_tn={max_tn} mxu_dtype={mxu_dtype}")

    k1, k2, k3 = jax.random.split(key, 3)
    # Primary path: resident fused weight (single column tile), f32.
    check(32, 2, 8, k1)
    # Column-tiled / streamed-weight path (forces ncol > 1 at a small size).
    check(200, 2, 8, k2, max_tn=128)
    # Optional bf16-MXU precision mode (f32 accumulate + f32 gate math).
    check(32, 2, 8, k3, mxu_dtype=jnp.bfloat16, atol=5e-2, rtol=5e-2)

    print("KERNEL_OK")
</pallas_src>

<mosaic_0001>
module attributes {stable_mosaic.version = 11 : i64} {
  func.func @_highway_kernel_resident(%arg0: i32, %arg1: memref<8x128xf32, #tpu.memory_space<vmem>>, %arg2: memref<128x256xf32, #tpu.memory_space<vmem>>, %arg3: memref<1x256xf32, #tpu.memory_space<vmem>>, %arg4: memref<8x128xf32, #tpu.memory_space<vmem>>) attributes {dimension_semantics = [#tpu.dimension_semantics<parallel>], iteration_bounds = array<i64: 2>, scalar_prefetch = 0 : i64, scratch_operands = 0 : i64, tpu.core_type = #tpu.core_type<tc>, window_params = [{transform_indices = @transform_0, window_bounds = array<i64: 8, 128>}, {pipeline_mode = #tpu.pipeline_mode<synchronous>, transform_indices = @transform_1, window_bounds = array<i64: 128, 256>}, {pipeline_mode = #tpu.pipeline_mode<synchronous>, transform_indices = @transform_2, window_bounds = array<i64: 1, 256>}, {transform_indices = @transform_3, window_bounds = array<i64: 8, 128>}]} {
    %c0 = arith.constant 0 : index
    %c0_0 = arith.constant 0 : index
    %0 = vector.load %arg1[%c0, %c0_0] : memref<8x128xf32, #tpu.memory_space<vmem>>, vector<8x128xf32>
    %c0_1 = arith.constant 0 : index
    %c0_2 = arith.constant 0 : index
    %1 = vector.load %arg2[%c0_1, %c0_2] : memref<128x256xf32, #tpu.memory_space<vmem>>, vector<128x256xf32>
    %cst = arith.constant dense<0.000000e+00> : vector<8x256xf32>
    %2 = tpu.matmul %0, %1, %cst {dimension_numbers = #tpu.dot_dimension_numbers<[1], [0], [0], [1], [0, 0, 1, 1], [], []>} : vector<8x128xf32>, vector<128x256xf32>, vector<8x256xf32> -> vector<8x256xf32>
    %c0_3 = arith.constant 0 : index
    %c0_4 = arith.constant 0 : index
    %3 = vector.load %arg3[%c0_3, %c0_4] : memref<1x256xf32, #tpu.memory_space<vmem>>, vector<1x256xf32>
    %4 = vector.broadcast %3 : vector<1x256xf32> to vector<8x256xf32>
    %5 = arith.addf %2, %4 : vector<8x256xf32>
    %6 = vector.extract_strided_slice %5 {offsets = [0, 0], sizes = [8, 128], strides = [1, 1]} : vector<8x256xf32> to vector<8x128xf32>
    %7 = vector.extract_strided_slice %5 {offsets = [0, 128], sizes = [8, 128], strides = [1, 1]} : vector<8x256xf32> to vector<8x128xf32>
    %8 = arith.negf %7 : vector<8x128xf32>
    %9 = math.exp %8 : vector<8x128xf32>
    %cst_5 = arith.constant 1.000000e+00 : f32
    %10 = vector.broadcast %cst_5 : f32 to vector<8x128xf32>
    %11 = arith.addf %10, %9 : vector<8x128xf32>
    %12 = arith.divf %10, %11 : vector<8x128xf32>
    %cst_6 = arith.constant 0.000000e+00 : f32
    %13 = vector.broadcast %cst_6 : f32 to vector<8x128xf32>
    %14 = arith.maximumf %6, %13 : vector<8x128xf32>
    %15 = arith.subf %14, %0 : vector<8x128xf32>
    %16 = arith.mulf %12, %15 : vector<8x128xf32>
    %17 = arith.addf %0, %16 : vector<8x128xf32>
    %c0_7 = arith.constant 0 : index
    %c0_8 = arith.constant 0 : index
    %18 = vector.load %arg4[%c0_7, %c0_8] : memref<8x128xf32, #tpu.memory_space<vmem>>, vector<8x128xf32>
    tpu.vector_store %arg4[%c0_7, %c0_8], %17 {strides = array<i32>} : memref<8x128xf32, #tpu.memory_space<vmem>>, vector<8x128xf32>,
    return
  }
  func.func @transform_0(%arg0: i32) -> (i32, i32) {
    %c0_i32 = arith.constant 0 : i32
    %c0_i32_0 = arith.constant 0 : i32
    return %arg0, %c0_i32 : i32, i32
  }
  func.func @transform_1(%arg0: i32) -> (i32, i32) {
    %c0_i32 = arith.constant 0 : i32
    %c0_i32_0 = arith.constant 0 : i32
    %c0_i32_1 = arith.constant 0 : i32
    return %c0_i32, %c0_i32_0 : i32, i32
  }
  func.func @transform_2(%arg0: i32) -> (i32, i32) {
    %c0_i32 = arith.constant 0 : i32
    %c0_i32_0 = arith.constant 0 : i32
    %c0_i32_1 = arith.constant 0 : i32
    return %c0_i32, %c0_i32_0 : i32, i32
  }
  func.func @transform_3(%arg0: i32) -> (i32, i32) {
    %c0_i32 = arith.constant 0 : i32
    %c0_i32_0 = arith.constant 0 : i32
    return %arg0, %c0_i32 : i32, i32
  }
}

</mosaic_0001>

<llo_original>
// kernel: highway_network.1
$region0: #{highway_network.1}
  #allocation0 [shape = 'u32[]', space=smem, size = 0x4, offset = 0x4, fixed_abs, tag = 'smem constant byte address 0x4 - core index']
  #allocation1 [shape = 'u32[144,128]{1,0:T(1,128)}', space=vmem, size = 0x12000, scoped, tag = 'internal scratch']
  %s0 = inlined_call_operand.vmem [shape: f32[16,128], index: 0, kind: input, shape index: {}]
  %s1 = inlined_call_operand.hbm [shape: f32[128,256], index: 1, kind: input, shape index: {}]
  %s2 = inlined_call_operand.vmem [shape: f32[1,256], index: 2, kind: input, shape index: {}]
  %s3 = inlined_call_operand.vmem [shape: f32[16,128], index: 3, kind: output, shape index: {}]
  %s4 = sld [smem:[#allocation0]]
  $region49: #{highway_network.1} parent=0
    _
  %s6 = ssub.s32 1, %s4
  %s7 = scalar_select 0, %s6, %s4
  $region1: #{highway_network.1} parent=0
    #allocation2 [shape = 'u8[131072]{0}', space=vmem, size = 0x20000, scoped, tag = 'input window, operand 1, single buffered']
    #allocation3 [shape = 's32[2]{0}', space=sflag, size = 0x8, scoped, tag = 'scoped memory for highway_network.1']
    %8 = vsyncpa [#allocation3], 0
    loop: start=0, step=1, limit=4
    $region2: #{highway_network.1} parent=1 // loop_pre_header
      _
    $region3: #{highway_network.1} parent=1 // loop_header
      %s10 = sphi 0, %s14
      %p11 = scmp.ge.s32.totalorder %s10, 4
      %s20 = sphi 0, %s22
      %s23 = sphi 0, %s20
      %s24 = sphi 0, %s23
      %s40 = sphi 0, %s24
      %s44 = sphi 0, %s44
      %s46 = sphi 0, %s44
      %s47 = sphi 0, %s46
      %s61 = sphi 0, %s47
      %s65 = sphi 0, %s65
      %s67 = sphi 0, %s65
      %s68 = sphi 0, %s67
      %s82 = sphi 0, %s68
      %s88 = sphi 0, %s90
      %s91 = sphi 0, %s88
      %s92 = sphi 0, %s91
      %s108 = sphi 0, %s92
    $region4: #{highway_network.1} parent=1 // loop_header_branch
      %13 = sbr.rel (%p11) target = $region8
    $region5: #{highway_network.1} parent=1 // loop_body
      %s15 = ssub.s32 %s10, 1
      %s16 = ssub.s32 %s10, 2
      %s17 = sadd.s32 %s10, 1
      %s18 = ssub.s32 %s10, %s17
      %p19 = scmp.eq.s32.totalorder %s18, 0
      %s21 = sadd.s32 %s20, 1
      %s22 = scalar_select %p19, %s20, %s21
      %p25 = pneg %p19
      %p26 = scmp.eq.s32.totalorder %s10, 1
      %p27 = por %p25, %p26
      %p28 = scmp.ne.s32.totalorder %s20, %s23
      %p29 = scmp.eq.s32.totalorder %s10, 0
      %p30 = por %p28, %p29
      %p31 = scmp.ne.s32.totalorder %s20, %s23
      %p32 = scmp.eq.s32.totalorder %s15, 1
      %p33 = por %p31, %p32
      %p34 = scmp.ne.s32.totalorder %s23, %s24
      %p35 = scmp.eq.s32.totalorder %s15, 0
      %p36 = por %p34, %p35
      %p37 = scmp.ne.s32.totalorder %s23, %s24
      %p38 = scmp.eq.s32.totalorder %s16, 1
      %p39 = por %p37, %p38
      %p41 = scmp.ne.s32.totalorder %s24, %s40
      %p42 = scmp.eq.s32.totalorder %s16, 0
      %p43 = por %p41, %p42
      %s45 = sadd.s32 %s44, 1
      %p48 = scmp.eq.s32.totalorder %s10, 1
      %p49 = scmp.ne.s32.totalorder %s44, %s46
      %p50 = scmp.eq.s32.totalorder %s10, 0
      %p51 = por %p49, %p50
      %p52 = scmp.ne.s32.totalorder %s44, %s46
      %p53 = scmp.eq.s32.totalorder %s15, 1
      %p54 = por %p52, %p53
      %p55 = scmp.ne.s32.totalorder %s46, %s47
      %p56 = scmp.eq.s32.totalorder %s15, 0
      %p57 = por %p55, %p56
      %p58 = scmp.ne.s32.totalorder %s46, %s47
      %p59 = scmp.eq.s32.totalorder %s16, 1
      %p60 = por %p58, %p59
      %p62 = scmp.ne.s32.totalorder %s47, %s61
      %p63 = scmp.eq.s32.totalorder %s16, 0
      %p64 = por %p62, %p63
      %s66 = sadd.s32 %s65, 1
      %p69 = scmp.eq.s32.totalorder %s10, 1
      %p70 = scmp.ne.s32.totalorder %s65, %s67
      %p71 = scmp.eq.s32.totalorder %s10, 0
      %p72 = por %p70, %p71
      %p73 = scmp.ne.s32.totalorder %s65, %s67
      %p74 = scmp.eq.s32.totalorder %s15, 1
      %p75 = por %p73, %p74
      %p76 = scmp.ne.s32.totalorder %s67, %s68
      %p77 = scmp.eq.s32.totalorder %s15, 0
      %p78 = por %p76, %p77
      %p79 = scmp.ne.s32.totalorder %s67, %s68
      %p80 = scmp.eq.s32.totalorder %s16, 1
      %p81 = por %p79, %p80
      %p83 = scmp.ne.s32.totalorder %s68, %s82
      %p84 = scmp.eq.s32.totalorder %s16, 0
      %p85 = por %p83, %p84
      %s86 = ssub.s32 %s10, %s17
      %p87 = scmp.eq.s32.totalorder %s86, 0
      %s89 = sadd.s32 %s88, 1
      %s90 = scalar_select %p87, %s88, %s89
      %p93 = pneg %p87
      %p94 = scmp.eq.s32.totalorder %s10, 1
      %p95 = por %p93, %p94
      %p96 = scmp.ne.s32.totalorder %s88, %s91
      %p97 = scmp.eq.s32.totalorder %s10, 0
      %p98 = por %p96, %p97
      %p99 = scmp.ne.s32.totalorder %s88, %s91
      %p100 = scmp.eq.s32.totalorder %s15, 1
      %p101 = por %p99, %p100
      %p102 = scmp.ne.s32.totalorder %s91, %s92
      %p103 = scmp.eq.s32.totalorder %s15, 0
      %p104 = por %p102, %p103
      %p105 = scmp.ne.s32.totalorder %s91, %s92
      %p106 = scmp.eq.s32.totalorder %s16, 1
      %p107 = por %p105, %p106
      %p109 = scmp.ne.s32.totalorder %s92, %s108
      %p110 = scmp.eq.s32.totalorder %s16, 0
      %p111 = por %p109, %p110
      %p112 = scmp.le.s32.totalorder 1, %s10
      %p113 = scmp.lt.s32.totalorder %s10, 3
      %p114 = pnand %p112, %p113
      %p115 = pneg %p114
      // Predicated region
      $region9: #{highway_network.1} parent=5 // pred_check
        _
      $region10: #{highway_network.1} parent=5 // pred_check_branch
        %117 = sbr.rel (%p114) target = $region12
      $region11: #{highway_network.1} parent=5 // pred_region
        %s118 = ssub.s32 %s10, 1
        // Predicated region
        $region13: #{highway_network.1} parent=11 // pred_check
          %p119 = pneg %p57
        $region14: #{highway_network.1} parent=11 // pred_check_branch
          %121 = sbr.rel (%p119) target = $region16
        $region15: #{highway_network.1} parent=11 // pred_region
          %s123 = ssub.s32 4096, 4096
          %124 = vsyncadd [#allocation3], %s123
          %s125 = sshll.u32 [#allocation2], 4
          %s126 = int_to_ptr.vmem [resolvable:$true] %s125
          %131 = dma.hbm_to_vmem [thread:$0]  %s1, 4096, %s126, [#allocation3], 256, 256, 16
        $region16: #{highway_network.1} parent=11 // pred_fallthru
          _
        // Predicated region
        $region17: #{highway_network.1} parent=11 // pred_check
          %p132 = pneg %p78
        $region18: #{highway_network.1} parent=11 // pred_check_branch
          %134 = sbr.rel (%p132) target = $region20
        $region19: #{highway_network.1} parent=11 // pred_region
          _
        $region20: #{highway_network.1} parent=11 // pred_fallthru
          _
      $region12: #{highway_network.1} parent=5 // pred_fallthru
        _
      %p135 = scmp.lt.s32.totalorder %s10, 2
      // Predicated region
      $region21: #{highway_network.1} parent=5 // pred_check
        %p136 = pneg %p135
      $region22: #{highway_network.1} parent=5 // pred_check_branch
        %138 = sbr.rel (%p136) target = $region24
      $region23: #{highway_network.1} parent=5 // pred_region
        // Predicated region
        $region25: #{highway_network.1} parent=23 // pred_check
          %p139 = pneg %p30
        $region26: #{highway_network.1} parent=23 // pred_check_branch
          %141 = sbr.rel (%p139) target = $region28
        $region27: #{highway_network.1} parent=23 // pred_region
          %p142 = scmp.lt.s32.totalorder %s10, 1
          %s143 = scalar_select %p142, %s10, 1
          %s144 = smul.addr %s143, 8
          %s145 = scalar_lea.vmem %s0, %s144
        $region28: #{highway_network.1} parent=23 // pred_fallthru
          _
      $region24: #{highway_network.1} parent=5 // pred_fallthru
        _
      %p146 = scmp.le.s32.totalorder 1, %s10
      %p147 = scmp.lt.s32.totalorder %s10, 3
      %p148 = pnand %p146, %p147
      %p149 = pneg %p148
      // Predicated region
      $region29: #{highway_network.1} parent=5 // pred_check
        _
      $region30: #{highway_network.1} parent=5 // pred_check_branch
        %151 = sbr.rel (%p148) target = $region32
      $region31: #{highway_network.1} parent=5 // pred_region
        %s152 = ssub.s32 %s10, 1
        // Predicated region
        $region33: #{highway_network.1} parent=31 // pred_check
          %p153 = pneg %p57
        $region34: #{highway_network.1} parent=31 // pred_check_branch
          %155 = sbr.rel (%p153) target = $region36
        $region35: #{highway_network.1} parent=31 // pred_region
          %156 = dma.done [#allocation3], 4096
        $region36: #{highway_network.1} parent=31 // pred_fallthru
          _
        %p157 = scmp.lt.s32.totalorder %s15, 1
        %s158 = scalar_select %p157, %s15, 1
        %s159 = smul.addr %s158, 8
        %s160 = scalar_lea.vmem %s0, %s159
        %p161 = pneg %p36
        %p162 = pneg %p33
        %p163 = pneg %p57
        %p164 = pneg %p54
        %p165 = pneg %p78
        %p166 = pneg %p75
        %p167 = pneg %p104
        %p168 = pneg %p101
        %p169 = scmp.lt.s32.totalorder %s15, 1
        %s170 = scalar_select %p169, %s15, 1
        %s171 = smul.addr %s170, 8
        %s172 = scalar_lea.vmem %s3, %s171
        %p173 = scmp.lt.s32.totalorder %s15, 1
        %s174 = scalar_select %p173, %s15, 1
        %s175 = smul.addr %s174, 8
        %s176 = scalar_lea.vmem %s0, %s175
        %p177 = scmp.lt.s32.totalorder %s15, 1
        %s178 = scalar_select %p177, %s15, 1
        %s179 = smul.addr %s178, 8
        %s180 = scalar_lea.vmem %s3, %s179
        %v181 = vld [vmem:[%s176] sm:$0xff]
        %v182 = vld [vmem:[#allocation2] sm:$0xff]
        %v183 = vld [vmem:[#allocation2 + $0x8] sm:$0xff]
        %v184 = vld [vmem:[#allocation2 + $0x10] sm:$0xff]
        %v185 = vld [vmem:[#allocation2 + $0x18] sm:$0xff]
        %v186 = vld [vmem:[#allocation2 + $0x20] sm:$0xff]
        %v187 = vld [vmem:[#allocation2 + $0x28] sm:$0xff]
        %v188 = vld [vmem:[#allocation2 + $0x30] sm:$0xff]
        %v189 = vld [vmem:[#allocation2 + $0x38] sm:$0xff]
        %v190 = vld [vmem:[#allocation2 + $0x40] sm:$0xff]
        %v191 = vld [vmem:[#allocation2 + $0x48] sm:$0xff]
        %v192 = vld [vmem:[#allocation2 + $0x50] sm:$0xff]
        %v193 = vld [vmem:[#allocation2 + $0x58] sm:$0xff]
        %v194 = vld [vmem:[#allocation2 + $0x60] sm:$0xff]
        %v195 = vld [vmem:[#allocation2 + $0x68] sm:$0xff]
        %v196 = vld [vmem:[#allocation2 + $0x70] sm:$0xff]
        %v197 = vld [vmem:[#allocation2 + $0x78] sm:$0xff]
        %v198 = vld [vmem:[#allocation2 + $0x80] sm:$0xff]
        %v199 = vld [vmem:[#allocation2 + $0x88] sm:$0xff]
        %v200 = vld [vmem:[#allocation2 + $0x90] sm:$0xff]
        %v201 = vld [vmem:[#allocation2 + $0x98] sm:$0xff]
        %v202 = vld [vmem:[#allocation2 + $0xa0] sm:$0xff]
        %v203 = vld [vmem:[#allocation2 + $0xa8] sm:$0xff]
        %v204 = vld [vmem:[#allocation2 + $0xb0] sm:$0xff]
        %v205 = vld [vmem:[#allocation2 + $0xb8] sm:$0xff]
        %v206 = vld [vmem:[#allocation2 + $0xc0] sm:$0xff]
        %v207 = vld [vmem:[#allocation2 + $0xc8] sm:$0xff]
        %v208 = vld [vmem:[#allocation2 + $0xd0] sm:$0xff]
        %v209 = vld [vmem:[#allocation2 + $0xd8] sm:$0xff]
        %v210 = vld [vmem:[#allocation2 + $0xe0] sm:$0xff]
        %v211 = vld [vmem:[#allocation2 + $0xe8] sm:$0xff]
        %v212 = vld [vmem:[#allocation2 + $0xf0] sm:$0xff]
        %v213 = vld [vmem:[#allocation2 + $0xf8] sm:$0xff]
        %v214 = vld [vmem:[%s2] sm:$0x3]
        %v216 = vlaneseq
        %v217 = vshrl.u32 %v216, 7
        %v218 = vsub.s32 0, %v217
        %v219 = vrot.slane %v214, %v218
        %v220 = vlaneseq
        %v221 = vshrl.u32 %v220, 7
        %v222 = vsub.s32 1, %v221
        %v223 = vrot.slane %v214, %v222
        %226 = vmatprep.subr.mxu0 %v213
        %227 = vmatpush1.msra.mxu0 %v212
        %228 = vmatprep.subr.mxu0 %v211
        %229 = vmatpush1.msra.mxu0 %v210
        %230 = vmatprep.subr.mxu0 %v209
        %231 = vmatpush1.msra.mxu0 %v208
        %232 = vmatprep.subr.mxu0 %v207
        %233 = vmatpush1.msra.mxu0 %v206
        %234 = vmatprep.subr.mxu0 %v205
        %235 = vmatpush1.msra.mxu0 %v204
        %236 = vmatprep.subr.mxu0 %v203
        %237 = vmatpush1.msra.mxu0 %v202
        %238 = vmatprep.subr.mxu0 %v201
        %239 = vmatpush1.msra.mxu0 %v200
        %240 = vmatprep.subr.mxu0 %v199
        %241 = vmatpush1.msra.mxu0 %v198
        %242 = vmatprep.subr.mxu0 %v197
        %243 = vmatpush1.msra.mxu0 %v196
        %244 = vmatprep.subr.mxu0 %v195
        %245 = vmatpush1.msra.mxu0 %v194
        %246 = vmatprep.subr.mxu0 %v193
        %247 = vmatpush1.msra.mxu0 %v192
        %248 = vmatprep.subr.mxu0 %v191
        %249 = vmatpush1.msra.mxu0 %v190
        %250 = vmatprep.subr.mxu0 %v189
        %251 = vmatpush1.msra.mxu0 %v188
        %252 = vmatprep.subr.mxu0 %v187
        %253 = vmatpush1.msra.mxu0 %v186
        %254 = vmatprep.subr.mxu0 %v185
        %255 = vmatpush1.msra.mxu0 %v184
        %256 = vmatprep.subr.mxu0 %v183
        %257 = vmatpush1.msra.mxu0 %v182
        %258 = vmatprep.subr.mxu0 0.0
        %259 = vmatpush2.msra.mxu0 0.0
        %260 = vmatprep.subr.mxu0 0.0
        %261 = vmatpush2.msra.mxu0 0.0
        %262 = vmatprep.subr.mxu0 0.0
        %263 = vmatpush2.msra.mxu0 0.0
        %264 = vmatprep.subr.mxu0 0.0
        %265 = vmatpush2.msra.mxu0 0.0
        %266 = vmatprep.subr.mxu0 0.0
        %267 = vmatpush2.msra.mxu0 0.0
        %268 = vmatprep.subr.mxu0 0.0
        %269 = vmatpush2.msra.mxu0 0.0
        %270 = vmatprep.subr.mxu0 0.0
        %271 = vmatpush2.msra.mxu0 0.0
        %272 = vmatprep.subr.mxu0 0.0
        %273 = vmatpush2.msra.mxu0 0.0
        %274 = vmatprep.subr.mxu0 0.0
        %275 = vmatpush2.msra.mxu0 0.0
        %276 = vmatprep.subr.mxu0 0.0
        %277 = vmatpush2.msra.mxu0 0.0
        %278 = vmatprep.subr.mxu0 0.0
        %279 = vmatpush2.msra.mxu0 0.0
        %280 = vmatprep.subr.mxu0 0.0
        %281 = vmatpush2.msra.mxu0 0.0
        %282 = vmatprep.subr.mxu0 0.0
        %283 = vmatpush2.msra.mxu0 0.0
        %284 = vmatprep.subr.mxu0 0.0
        %285 = vmatpush2.msra.mxu0 0.0
        %286 = vmatprep.subr.mxu0 0.0
        %287 = vmatpush2.msra.mxu0 0.0
        %288 = vmatprep.subr.mxu0 0.0
        %289 = vmatpush2.msra.mxu0 0.0
        %290 = vmatprep.mubr.f32.mxu0 0.0
        %291 = vmatmul.mubr.f32.gmra.mxu0 %v181
        %v292 = vpop.f32.mrf.mxu0
        %v293 = vadd.f32 %v219, %v292
        %v294 = vpop.f32.mrf.mxu0
        %v295 = vadd.f32 %v223, %v294
        %296 = vdwg.mxu0
        %v297 = vxor.u32 %v295, 2147483648
        %v298 = vmul.f32 %v297, 1.442695
        %v299 = vpow.pop %v298
        %v300 = vadd.f32 %v299, 1.0
        %v301 = vrcp.pop %v300
        %v302 = vmul.f32 1.0, %v301
        %v303 = vmax.f32 %v293, 0.0
        %v304 = vsub.f32 %v303, %v181
        %v305 = vmul.f32 %v302, %v304
        %v306 = vadd.f32 %v181, %v305
        %307 = vst [vmem:[%s180] sm:$0xff] %v306
        %p308 = scmp.lt.s32.totalorder %s15, 1
        %s309 = scalar_select %p308, %s15, 1
        %s310 = smul.addr %s309, 8
        %s311 = scalar_lea.vmem %s3, %s310
        // Predicated region
        $region37: #{highway_network.1} parent=31 // pred_check
          %p312 = pneg %p101
        $region38: #{highway_network.1} parent=31 // pred_check_branch
          %314 = sbr.rel (%p312) target = $region40
        $region39: #{highway_network.1} parent=31 // pred_region
          _
        $region40: #{highway_network.1} parent=31 // pred_fallthru
          _
      $region32: #{highway_network.1} parent=5 // pred_fallthru
        _
      %p315 = scmp.le.s32.totalorder 2, %s10
      // Predicated region
      $region41: #{highway_network.1} parent=5 // pred_check
        %p316 = pneg %p315
      $region42: #{highway_network.1} parent=5 // pred_check_branch
        %318 = sbr.rel (%p316) target = $region44
      $region43: #{highway_network.1} parent=5 // pred_region
        %s319 = ssub.s32 %s10, 2
        // Predicated region
        $region45: #{highway_network.1} parent=43 // pred_check
          %p320 = pneg %p107
        $region46: #{highway_network.1} parent=43 // pred_check_branch
          %322 = sbr.rel (%p320) target = $region48
        $region47: #{highway_network.1} parent=43 // pred_region
          %p323 = scmp.lt.s32.totalorder %s16, 1
          %s324 = scalar_select %p323, %s16, 1
          %s325 = smul.addr %s324, 8
          %s326 = scalar_lea.vmem %s3, %s325
        $region48: #{highway_network.1} parent=43 // pred_fallthru
          _
      $region44: #{highway_network.1} parent=5 // pred_fallthru
        _
    $region6: #{highway_network.1} parent=1 // loop_footer
      %s14 = sadd.s32 1, %s10
    $region7: #{highway_network.1} parent=1 // loop_footer_branch
      %9 = sbr.rel target = $region3
    $region8: #{highway_network.1} parent=1 // loop_exit
      _
    %327 = vsyncpa [#allocation3], 1
    %s328 = scalar_lea.sflag [#allocation3], 1
    %329 = vsyncpa %s328, 1

</llo_original>
